<compile_context>
chip_gen: v6e
topology: v6e:2x2x1
jax: 0.10.0
libtpu: 0.0.40
codegen_flags: <defaults>
</compile_context>

<pallas_src>
import jax
import jax.numpy as jnp
from jax.experimental import pallas as pl
from jax.experimental.pallas import tpu as pltpu

LANE = 128
SUBLANE = 8


def _round_up(x, m):
    return ((x + m - 1) // m) * m


def _actor_critic_kernel(state_ref, w1_ref, b1_ref, w2_ref, b2_ref,
                         act_ref, val_ref):
    # Fused layer 1 (actor || critic along the lane axis): bf16 into the MXU,
    # f32 accumulate; bias + ReLU in f32 (native on every generation's VPU).
    x = state_ref[...].astype(jnp.bfloat16)
    h = jnp.dot(x, w1_ref[...], preferred_element_type=jnp.float32)
    h = jnp.maximum(h + b1_ref[...], 0.0)
    # Fused layer 2: block-diagonal heads over a narrow (8-wide) output.
    y = jnp.dot(h.astype(jnp.bfloat16), w2_ref[...],
                preferred_element_type=jnp.float32)
    y = y + b2_ref[...]
    n_act = act_ref.shape[-1]
    act_ref[...] = y[:, :n_act].astype(act_ref.dtype)
    val_ref[...] = y[:, n_act:n_act + 1].astype(val_ref.dtype)


def fuse_params(params):
    """Build fused weights ONCE, outside the kernel.

    Layer 1: concat actor/critic weights along the output axis -> [obs, 2H].
    Layer 2: block-diagonal [2H, out_w] (actor block over the first H rows,
             critic column over the second H rows); out_w is only padded to a
             sublane multiple (8), NOT to 128.
    """
    w1a, b1a, w2a, b2a = params["w1a"], params["b1a"], params["w2a"], params["b2a"]
    w1c, b1c, w2c, b2c = params["w1c"], params["b1c"], params["w2c"], params["b2c"]
    hid = w1a.shape[1]
    n_actions = w2a.shape[1]
    out_w = max(SUBLANE, _round_up(n_actions + 1, SUBLANE))

    w1f = jnp.concatenate([w1a, w1c], axis=1).astype(jnp.bfloat16)      # [obs, 2H]
    b1f = jnp.concatenate([b1a, b1c], axis=1).astype(jnp.float32)       # [1, 2H]

    w2f = jnp.zeros((2 * hid, out_w), jnp.float32)
    w2f = w2f.at[:hid, :n_actions].set(w2a)          # actor head
    w2f = w2f.at[hid:, n_actions].set(w2c[:, 0])     # critic head (single column)
    w2f = w2f.astype(jnp.bfloat16)                                       # [2H, 8]

    b2f = jnp.zeros((1, out_w), jnp.float32)
    b2f = b2f.at[:, :n_actions].set(b2a)
    b2f = b2f.at[:, n_actions].set(b2c[0, 0])                            # [1, 8]

    return dict(w1f=w1f, b1f=b1f, w2f=w2f, b2f=b2f)


def _choose_batch_tile(B, block_b, min_steps=4):
    """Largest sublane-aligned tile <= block_b, but keep >= min_steps grid
    steps for large batches so the parallel axis can shard across 2 TCs (v7x)."""
    target = _round_up(max(1, pl.cdiv(B, min_steps)), SUBLANE)
    tb = min(block_b, max(SUBLANE, target))
    tb = min(tb, _round_up(B, SUBLANE))
    return max(tb, SUBLANE)


def actor_critic_forward(state, fused, n_actions, *, block_b=2048):
    """state: [B, obs_dim] f32.  Returns (action_pred [B, n_actions], value_pred [B, 1])."""
    B, obs = state.shape
    w1f, b1f, w2f, b2f = fused["w1f"], fused["b1f"], fused["w2f"], fused["b2f"]
    two_h = w1f.shape[1]
    out_w = w2f.shape[1]

    tb = _choose_batch_tile(B, block_b)
    grid = (pl.cdiv(B, tb),)   # no batch padding: partial edge block handled by Pallas

    flops = 2 * B * (obs * two_h + two_h * out_w)
    bytes_accessed = (
        B * obs * 4                     # state (f32)
        + w1f.size * 2 + w2f.size * 2   # bf16 weights
        + b1f.size * 4 + b2f.size * 4   # f32 biases
        + B * (n_actions + 1) * 4       # narrow outputs (f32)
    )
    cost = pl.CostEstimate(flops=flops, transcendentals=0,
                           bytes_accessed=bytes_accessed)

    action_pred, value_pred = pl.pallas_call(
        _actor_critic_kernel,
        out_shape=(
            jax.ShapeDtypeStruct((B, n_actions), jnp.float32),
            jax.ShapeDtypeStruct((B, 1), jnp.float32),
        ),
        grid=grid,
        in_specs=[
            pl.BlockSpec((tb, obs), lambda i: (i, 0)),        # state: tiled over batch
            pl.BlockSpec((obs, two_h), lambda i: (0, 0)),     # weights: VMEM-resident
            pl.BlockSpec((1, two_h), lambda i: (0, 0)),
            pl.BlockSpec((two_h, out_w), lambda i: (0, 0)),
            pl.BlockSpec((1, out_w), lambda i: (0, 0)),
        ],
        out_specs=(
            pl.BlockSpec((tb, n_actions), lambda i: (i, 0)),
            pl.BlockSpec((tb, 1), lambda i: (i, 0)),
        ),
        compiler_params=pltpu.CompilerParams(
            dimension_semantics=("parallel",),
            vmem_limit_bytes=32 * 1024 * 1024,   # safe on v5e/v6e (128 MiB) and v7x (64 MiB)
        ),
        cost_estimate=cost,
    )(state, w1f, b1f, w2f, b2f)

    return action_pred, value_pred


def init_params(key, obs_dim, hidden_dim, n_actions):
    """Deterministic synthetic parameter init (torch.nn.Linear-style uniform)."""
    ks = jax.random.split(key, 8)

    def lin(kw, kb, fan_in, fan_out):
        bound = 1.0 / jnp.sqrt(jnp.float32(fan_in))
        w = jax.random.uniform(kw, (fan_in, fan_out), jnp.float32, -bound, bound)
        b = jax.random.uniform(kb, (1, fan_out), jnp.float32, -bound, bound)
        return w, b

    w1a, b1a = lin(ks[0], ks[1], obs_dim, hidden_dim)
    w2a, b2a = lin(ks[2], ks[3], hidden_dim, n_actions)
    w1c, b1c = lin(ks[4], ks[5], obs_dim, hidden_dim)
    w2c, b2c = lin(ks[6], ks[7], hidden_dim, 1)
    return dict(w1a=w1a, b1a=b1a, w2a=w2a, b2a=b2a,
                w1c=w1c, b1c=b1c, w2c=w2c, b2c=b2c)


def reference_forward(state, p):
    """Pure-JAX reference mirroring the kernel numerics (bf16 operands, f32 accumulate)."""
    xb = state.astype(jnp.bfloat16)
    h_a = jnp.maximum(
        jnp.dot(xb, p["w1a"].astype(jnp.bfloat16),
                preferred_element_type=jnp.float32) + p["b1a"], 0.0)
    act = jnp.dot(h_a.astype(jnp.bfloat16), p["w2a"].astype(jnp.bfloat16),
                  preferred_element_type=jnp.float32) + p["b2a"]
    h_c = jnp.maximum(
        jnp.dot(xb, p["w1c"].astype(jnp.bfloat16),
                preferred_element_type=jnp.float32) + p["b1c"], 0.0)
    val = jnp.dot(h_c.astype(jnp.bfloat16), p["w2c"].astype(jnp.bfloat16),
                  preferred_element_type=jnp.float32) + p["b2c"]
    return act, val


if __name__ == "__main__":
    B, OBS, HID, ACT = 8, 32, 64, 4

    key = jax.random.PRNGKey(0)
    k_state, k_params = jax.random.split(key)
    state = jax.random.normal(k_state, (B, OBS), jnp.float32)
    params = init_params(k_params, OBS, HID, ACT)

    fused = fuse_params(params)
    action_pred, value_pred = actor_critic_forward(state, fused, ACT)
    jax.block_until_ready((action_pred, value_pred))

    ref_act, ref_val = reference_forward(state, params)
    assert action_pred.shape == (B, ACT)
    assert value_pred.shape == (B, 1)
    assert jnp.allclose(action_pred, ref_act, atol=2e-2, rtol=2e-2)
    assert jnp.allclose(value_pred, ref_val, atol=2e-2, rtol=2e-2)

    print("KERNEL_OK")
</pallas_src>

<mosaic_0001>
module attributes {stable_mosaic.version = 11 : i64} {
  func.func @_actor_critic_kernel(%arg0: i32, %arg1: memref<8x32xf32, #tpu.memory_space<vmem>>, %arg2: memref<32x128xbf16, #tpu.memory_space<vmem>>, %arg3: memref<1x128xf32, #tpu.memory_space<vmem>>, %arg4: memref<128x8xbf16, #tpu.memory_space<vmem>>, %arg5: memref<1x8xf32, #tpu.memory_space<vmem>>, %arg6: memref<8x4xf32, #tpu.memory_space<vmem>>, %arg7: memref<8x1xf32, #tpu.memory_space<vmem>>) attributes {dimension_semantics = [#tpu.dimension_semantics<parallel>], iteration_bounds = array<i64: 1>, scalar_prefetch = 0 : i64, scratch_operands = 0 : i64, tpu.core_type = #tpu.core_type<tc>, window_params = [{transform_indices = @transform_0, window_bounds = array<i64: 8, 32>}, {pipeline_mode = #tpu.pipeline_mode<synchronous>, transform_indices = @transform_1, window_bounds = array<i64: 32, 128>}, {pipeline_mode = #tpu.pipeline_mode<synchronous>, transform_indices = @transform_2, window_bounds = array<i64: 1, 128>}, {pipeline_mode = #tpu.pipeline_mode<synchronous>, transform_indices = @transform_3, window_bounds = array<i64: 128, 8>}, {pipeline_mode = #tpu.pipeline_mode<synchronous>, transform_indices = @transform_4, window_bounds = array<i64: 1, 8>}, {transform_indices = @transform_5, window_bounds = array<i64: 8, 4>}, {transform_indices = @transform_6, window_bounds = array<i64: 8, 1>}]} {
    %c0 = arith.constant 0 : index
    %c0_0 = arith.constant 0 : index
    %0 = vector.load %arg1[%c0, %c0_0] : memref<8x32xf32, #tpu.memory_space<vmem>>, vector<8x32xf32>
    %1 = arith.truncf %0 : vector<8x32xf32> to vector<8x32xbf16>
    %c0_1 = arith.constant 0 : index
    %c0_2 = arith.constant 0 : index
    %2 = vector.load %arg2[%c0_1, %c0_2] : memref<32x128xbf16, #tpu.memory_space<vmem>>, vector<32x128xbf16>
    %cst = arith.constant dense<0.000000e+00> : vector<8x128xf32>
    %3 = tpu.matmul %1, %2, %cst {dimension_numbers = #tpu.dot_dimension_numbers<[1], [0], [0], [1], [0, 0, 1, 1], [], []>} : vector<8x32xbf16>, vector<32x128xbf16>, vector<8x128xf32> -> vector<8x128xf32>
    %c0_3 = arith.constant 0 : index
    %c0_4 = arith.constant 0 : index
    %4 = vector.load %arg3[%c0_3, %c0_4] : memref<1x128xf32, #tpu.memory_space<vmem>>, vector<1x128xf32>
    %5 = vector.broadcast %4 : vector<1x128xf32> to vector<8x128xf32>
    %6 = arith.addf %3, %5 : vector<8x128xf32>
    %cst_5 = arith.constant 0.000000e+00 : f32
    %7 = vector.broadcast %cst_5 : f32 to vector<8x128xf32>
    %8 = arith.maximumf %6, %7 : vector<8x128xf32>
    %9 = arith.truncf %8 : vector<8x128xf32> to vector<8x128xbf16>
    %c0_6 = arith.constant 0 : index
    %c0_7 = arith.constant 0 : index
    %10 = vector.load %arg4[%c0_6, %c0_7] : memref<128x8xbf16, #tpu.memory_space<vmem>>, vector<128x8xbf16>
    %cst_8 = arith.constant dense<0.000000e+00> : vector<8x8xf32>
    %11 = tpu.matmul %9, %10, %cst_8 {dimension_numbers = #tpu.dot_dimension_numbers<[1], [0], [0], [1], [0, 0, 1, 1], [], []>} : vector<8x128xbf16>, vector<128x8xbf16>, vector<8x8xf32> -> vector<8x8xf32>
    %c0_9 = arith.constant 0 : index
    %c0_10 = arith.constant 0 : index
    %12 = vector.load %arg5[%c0_9, %c0_10] : memref<1x8xf32, #tpu.memory_space<vmem>>, vector<1x8xf32>
    %13 = vector.broadcast %12 : vector<1x8xf32> to vector<8x8xf32>
    %14 = arith.addf %11, %13 : vector<8x8xf32>
    %15 = vector.extract_strided_slice %14 {offsets = [0, 0], sizes = [8, 4], strides = [1, 1]} : vector<8x8xf32> to vector<8x4xf32>
    %c0_11 = arith.constant 0 : index
    %c0_12 = arith.constant 0 : index
    %16 = vector.load %arg6[%c0_11, %c0_12] : memref<8x4xf32, #tpu.memory_space<vmem>>, vector<8x4xf32>
    tpu.vector_store %arg6[%c0_11, %c0_12], %15 {strides = array<i32>} : memref<8x4xf32, #tpu.memory_space<vmem>>, vector<8x4xf32>,
    %17 = vector.extract_strided_slice %14 {offsets = [0, 4], sizes = [8, 1], strides = [1, 1]} : vector<8x8xf32> to vector<8x1xf32>
    %c0_13 = arith.constant 0 : index
    %c0_14 = arith.constant 0 : index
    %18 = vector.load %arg7[%c0_13, %c0_14] : memref<8x1xf32, #tpu.memory_space<vmem>>, vector<8x1xf32>
    tpu.vector_store %arg7[%c0_13, %c0_14], %17 {strides = array<i32>} : memref<8x1xf32, #tpu.memory_space<vmem>>, vector<8x1xf32>,
    return
  }
  func.func @transform_0(%arg0: i32) -> (i32, i32) {
    %c0_i32 = arith.constant 0 : i32
    %c0_i32_0 = arith.constant 0 : i32
    return %arg0, %c0_i32 : i32, i32
  }
  func.func @transform_1(%arg0: i32) -> (i32, i32) {
    %c0_i32 = arith.constant 0 : i32
    %c0_i32_0 = arith.constant 0 : i32
    %c0_i32_1 = arith.constant 0 : i32
    return %c0_i32, %c0_i32_0 : i32, i32
  }
  func.func @transform_2(%arg0: i32) -> (i32, i32) {
    %c0_i32 = arith.constant 0 : i32
    %c0_i32_0 = arith.constant 0 : i32
    %c0_i32_1 = arith.constant 0 : i32
    return %c0_i32, %c0_i32_0 : i32, i32
  }
  func.func @transform_3(%arg0: i32) -> (i32, i32) {
    %c0_i32 = arith.constant 0 : i32
    %c0_i32_0 = arith.constant 0 : i32
    %c0_i32_1 = arith.constant 0 : i32
    return %c0_i32, %c0_i32_0 : i32, i32
  }
  func.func @transform_4(%arg0: i32) -> (i32, i32) {
    %c0_i32 = arith.constant 0 : i32
    %c0_i32_0 = arith.constant 0 : i32
    %c0_i32_1 = arith.constant 0 : i32
    return %c0_i32, %c0_i32_0 : i32, i32
  }
  func.func @transform_5(%arg0: i32) -> (i32, i32) {
    %c0_i32 = arith.constant 0 : i32
    %c0_i32_0 = arith.constant 0 : i32
    return %arg0, %c0_i32 : i32, i32
  }
  func.func @transform_6(%arg0: i32) -> (i32, i32) {
    %c0_i32 = arith.constant 0 : i32
    %c0_i32_0 = arith.constant 0 : i32
    return %arg0, %c0_i32 : i32, i32
  }
}

</mosaic_0001>

<llo_original>
// kernel: tpu_custom_call.1
$region0: #{tpu_custom_call.1}
  #allocation0 [shape = 'u32[]', space=smem, size = 0x4, offset = 0x4, fixed_abs, tag = 'smem constant byte address 0x4 - core index']
  #allocation1 [shape = 'u32[144,128]{1,0:T(1,128)}', space=vmem, size = 0x12000, scoped, tag = 'internal scratch']
  %s0 = inlined_call_operand.vmem [shape: f32[8,32], index: 0, kind: input, shape index: {}]
  %s1 = inlined_call_operand.vmem [shape: bf16[32,128], index: 1, kind: input, shape index: {}]
  %s2 = inlined_call_operand.vmem [shape: f32[1,128], index: 2, kind: input, shape index: {}]
  %s3 = inlined_call_operand.vmem [shape: bf16[128,8], index: 3, kind: input, shape index: {}]
  %s4 = inlined_call_operand.vmem [shape: f32[1,8], index: 4, kind: input, shape index: {}]
  %s5 = inlined_call_operand.vmem [shape: f32[8,4], index: 5, kind: output, shape index: {0}]
  %s6 = inlined_call_operand.vmem [shape: f32[8,1], index: 6, kind: output, shape index: {1}]
  %7 = xla_tuple %s5, %s6
  %s8 = sld [smem:[#allocation0]]
  $region38: #{tpu_custom_call.1} parent=0
    _
  %s10 = ssub.s32 1, %s8
  %s11 = scalar_select 0, %s10, %s8
  // Predicated region
  $region2: #{tpu_custom_call.1} parent=0 // pred_check
    _
  $region3: #{tpu_custom_call.1} parent=0 // pred_check_branch
    %13 = sbr.rel (0) target = $region5
  $region4: #{tpu_custom_call.1} parent=0 // pred_region
    _
  $region5: #{tpu_custom_call.1} parent=0 // pred_fallthru
    _
  // Predicated region
  $region6: #{tpu_custom_call.1} parent=0 // pred_check
    _
  $region7: #{tpu_custom_call.1} parent=0 // pred_check_branch
    %15 = sbr.rel (0) target = $region9
  $region8: #{tpu_custom_call.1} parent=0 // pred_region
    _
  $region9: #{tpu_custom_call.1} parent=0 // pred_fallthru
    _
  // Predicated region
  $region10: #{tpu_custom_call.1} parent=0 // pred_check
    _
  $region11: #{tpu_custom_call.1} parent=0 // pred_check_branch
    %17 = sbr.rel (0) target = $region13
  $region12: #{tpu_custom_call.1} parent=0 // pred_region
    _
  $region13: #{tpu_custom_call.1} parent=0 // pred_fallthru
    _
  // Predicated region
  $region14: #{tpu_custom_call.1} parent=0 // pred_check
    _
  $region15: #{tpu_custom_call.1} parent=0 // pred_check_branch
    %19 = sbr.rel (0) target = $region17
  $region16: #{tpu_custom_call.1} parent=0 // pred_region
    _
  $region17: #{tpu_custom_call.1} parent=0 // pred_fallthru
    _
  // Predicated region
  $region18: #{tpu_custom_call.1} parent=0 // pred_check
    _
  $region19: #{tpu_custom_call.1} parent=0 // pred_check_branch
    %21 = sbr.rel (0) target = $region21
  $region20: #{tpu_custom_call.1} parent=0 // pred_region
    _
  $region21: #{tpu_custom_call.1} parent=0 // pred_fallthru
    _
  %v23 = vld [vmem:[%s0] sm:$0xff]
  %v24 = vpack.c.bf16 %v23, %v23
  %v25 = vld [vmem:[%s1] sm:$0xf]
  %v26 = vld [vmem:[%s1 + $0x4] sm:$0xf]
  %v27 = vld [vmem:[%s1 + $0x8] sm:$0xf]
  %v28 = vld [vmem:[%s1 + $0xc] sm:$0xf]
  %v29 = vld [vmem:[%s2] sm:$0x1]
  %v31 = vlaneseq
  %v32 = vshrl.u32 %v31, 7
  %v33 = vsub.s32 0, %v32
  %v34 = vrot.slane %v29, %v33
  %v40 = vunpack.c.l.b16 %v25
  %v41 = vunpack.c.l.b16 %v26
  %v42 = vunpack.c.l.b16 %v27
  %v43 = vunpack.c.l.b16 %v28
  %v44 = vpack.c.b16 %v41, %v40
  %v45 = vpack.c.b16 %v43, %v42
  %vm48 = vcmask 261120
  %v50 = vsel %vm48, %v24, 0
  %52 = vmatprep.subr.bf16.mxu0 0
  %53 = vmatpush1.bf16.msra.mxu0 0
  %54 = vmatprep.subr.bf16.mxu0 0
  %55 = vmatpush1.bf16.msra.mxu0 0
  %56 = vmatprep.subr.bf16.mxu0 0
  %57 = vmatpush1.bf16.msra.mxu0 0
  %58 = vmatprep.subr.bf16.mxu0 0
  %59 = vmatpush1.bf16.msra.mxu0 0
  %60 = vmatprep.subr.bf16.mxu0 0
  %61 = vmatpush1.bf16.msra.mxu0 0
  %62 = vmatprep.subr.bf16.mxu0 0
  %63 = vmatpush1.bf16.msra.mxu0 0
  %64 = vmatprep.subr.bf16.mxu0 0
  %65 = vmatpush1.bf16.msra.mxu0 %v45
  %66 = vmatprep.subr.bf16.mxu0 0
  %67 = vmatpush1.bf16.msra.mxu0 %v44
  %68 = vmatprep.subr.bf16.mxu0 0
  %69 = vmatpush2.bf16.msra.mxu0 0
  %70 = vmatprep.subr.bf16.mxu0 0
  %71 = vmatpush2.bf16.msra.mxu0 0
  %72 = vmatprep.subr.bf16.mxu0 0
  %73 = vmatpush2.bf16.msra.mxu0 0
  %74 = vmatprep.subr.bf16.mxu0 0
  %75 = vmatpush2.bf16.msra.mxu0 0
  %76 = vmatprep.subr.bf16.mxu0 0
  %77 = vmatpush2.bf16.msra.mxu0 0
  %78 = vmatprep.subr.bf16.mxu0 0
  %79 = vmatpush2.bf16.msra.mxu0 0
  %80 = vmatprep.subr.bf16.mxu0 0
  %81 = vmatpush2.bf16.msra.mxu0 0
  %82 = vmatprep.subr.bf16.mxu0 0
  %83 = vmatpush2.bf16.msra.mxu0 0
  %84 = vmatprep.mubr.bf16.mxu0 0
  %85 = vmatmul.mubr.bf16.gmra.mxu0 %v50
  %v86 = vpop.f32.mrf.mxu0
  %v87 = vadd.f32 %v34, %v86
  %v88 = vpop.f32.mrf.mxu0
  %v89 = vpop.f32.mrf.mxu0
  %v90 = vpop.f32.mrf.mxu0
  %91 = vdwg.mxu0
  %v92 = vmax.f32 %v87, 0.0
  %v93 = vpack.c.bf16 %v92, %v92
  %v94 = vld [vmem:[%s3] sm:$0xf]
  %v95 = vld [vmem:[%s3 + $0x4] sm:$0xf]
  %v96 = vld [vmem:[%s3 + $0x8] sm:$0xf]
  %v97 = vld [vmem:[%s3 + $0xc] sm:$0xf]
  %v98 = vld [vmem:[%s3 + $0x10] sm:$0xf]
  %v99 = vld [vmem:[%s3 + $0x14] sm:$0xf]
  %v100 = vld [vmem:[%s3 + $0x18] sm:$0xf]
  %v101 = vld [vmem:[%s3 + $0x1c] sm:$0xf]
  %v102 = vld [vmem:[%s3 + $0x20] sm:$0xf]
  %v103 = vld [vmem:[%s3 + $0x24] sm:$0xf]
  %v104 = vld [vmem:[%s3 + $0x28] sm:$0xf]
  %v105 = vld [vmem:[%s3 + $0x2c] sm:$0xf]
  %v106 = vld [vmem:[%s3 + $0x30] sm:$0xf]
  %v107 = vld [vmem:[%s3 + $0x34] sm:$0xf]
  %v108 = vld [vmem:[%s3 + $0x38] sm:$0xf]
  %v109 = vld [vmem:[%s3 + $0x3c] sm:$0xf]
  %v110 = vld [vmem:[%s4] sm:$0x1]
  %v112 = vlaneseq
  %v113 = vshrl.u32 %v112, 7
  %v114 = vsub.s32 0, %v113
  %v115 = vrot.slane %v110, %v114
  %v133 = vunpack.c.l.b16 %v94
  %v134 = vunpack.c.l.b16 %v95
  %v135 = vunpack.c.l.b16 %v96
  %v136 = vunpack.c.l.b16 %v97
  %v137 = vunpack.c.l.b16 %v98
  %v138 = vunpack.c.l.b16 %v99
  %v139 = vunpack.c.l.b16 %v100
  %v140 = vunpack.c.l.b16 %v101
  %v141 = vunpack.c.l.b16 %v102
  %v142 = vunpack.c.l.b16 %v103
  %v143 = vunpack.c.l.b16 %v104
  %v144 = vunpack.c.l.b16 %v105
  %v145 = vunpack.c.l.b16 %v106
  %v146 = vunpack.c.l.b16 %v107
  %v147 = vunpack.c.l.b16 %v108
  %v148 = vunpack.c.l.b16 %v109
  %v149 = vpack.c.b16 %v134, %v133
  %v150 = vpack.c.b16 %v136, %v135
  %v151 = vpack.c.b16 %v138, %v137
  %v152 = vpack.c.b16 %v140, %v139
  %v153 = vpack.c.b16 %v142, %v141
  %v154 = vpack.c.b16 %v144, %v143
  %v155 = vpack.c.b16 %v146, %v145
  %v156 = vpack.c.b16 %v148, %v147
  %165 = vmatprep.subr.bf16.mxu0 0
  %166 = vmatpush1.bf16.msra.mxu0 %v156
  %167 = vmatprep.subr.bf16.mxu0 0
  %168 = vmatpush1.bf16.msra.mxu0 %v155
  %169 = vmatprep.subr.bf16.mxu0 0
  %170 = vmatpush1.bf16.msra.mxu0 %v154
  %171 = vmatprep.subr.bf16.mxu0 0
  %172 = vmatpush1.bf16.msra.mxu0 %v153
  %173 = vmatprep.subr.bf16.mxu0 0
  %174 = vmatpush1.bf16.msra.mxu0 %v152
  %175 = vmatprep.subr.bf16.mxu0 0
  %176 = vmatpush1.bf16.msra.mxu0 %v151
  %177 = vmatprep.subr.bf16.mxu0 0
  %178 = vmatpush1.bf16.msra.mxu0 %v150
  %179 = vmatprep.subr.bf16.mxu0 0
  %180 = vmatpush1.bf16.msra.mxu0 %v149
  %181 = vmatprep.subr.bf16.mxu0 0
  %182 = vmatpush2.bf16.msra.mxu0 0
  %183 = vmatprep.subr.bf16.mxu0 0
  %184 = vmatpush2.bf16.msra.mxu0 0
  %185 = vmatprep.subr.bf16.mxu0 0
  %186 = vmatpush2.bf16.msra.mxu0 0
  %187 = vmatprep.subr.bf16.mxu0 0
  %188 = vmatpush2.bf16.msra.mxu0 0
  %189 = vmatprep.subr.bf16.mxu0 0
  %190 = vmatpush2.bf16.msra.mxu0 0
  %191 = vmatprep.subr.bf16.mxu0 0
  %192 = vmatpush2.bf16.msra.mxu0 0
  %193 = vmatprep.subr.bf16.mxu0 0
  %194 = vmatpush2.bf16.msra.mxu0 0
  %195 = vmatprep.subr.bf16.mxu0 0
  %196 = vmatpush2.bf16.msra.mxu0 0
  %197 = vmatprep.mubr.bf16.mxu0 0
  %198 = vmatmul.mubr.bf16.gmra.mxu0 %v93
  %v199 = vpop.f32.mrf.mxu0
  %v200 = vadd.f32 %v115, %v199
  %v201 = vpop.f32.mrf.mxu0
  %v202 = vpop.f32.mrf.mxu0
  %v203 = vpop.f32.mrf.mxu0
  %204 = vdwg.mxu0
  %vm205 = vcmask 31744
  %206 = vst.msk [vmem:[%s5] sm:$0xff] %vm205, %v200
  %208 = vrot.lane.b32.xlu0 %v200, 124
  %v209 = vpop.permute.xlu0 %208
  %vm211 = vcmask 7168
  %212 = vst.msk [vmem:[%s6] sm:$0xff] %vm211, %v209
  // Predicated region
  $region22: #{tpu_custom_call.1} parent=0 // pred_check
    _
  $region23: #{tpu_custom_call.1} parent=0 // pred_check_branch
    %214 = sbr.rel (0) target = $region25
  $region24: #{tpu_custom_call.1} parent=0 // pred_region
    _
  $region25: #{tpu_custom_call.1} parent=0 // pred_fallthru
    _
  // Predicated region
  $region26: #{tpu_custom_call.1} parent=0 // pred_check
    _
  $region27: #{tpu_custom_call.1} parent=0 // pred_check_branch
    %216 = sbr.rel (0) target = $region29
  $region28: #{tpu_custom_call.1} parent=0 // pred_region
    _
  $region29: #{tpu_custom_call.1} parent=0 // pred_fallthru
    _
  // Predicated region
  $region30: #{tpu_custom_call.1} parent=0 // pred_check
    _
  $region31: #{tpu_custom_call.1} parent=0 // pred_check_branch
    %218 = sbr.rel (0) target = $region33
  $region32: #{tpu_custom_call.1} parent=0 // pred_region
    _
  $region33: #{tpu_custom_call.1} parent=0 // pred_fallthru
    _
  // Predicated region
  $region34: #{tpu_custom_call.1} parent=0 // pred_check
    _
  $region35: #{tpu_custom_call.1} parent=0 // pred_check_branch
    %220 = sbr.rel (0) target = $region37
  $region36: #{tpu_custom_call.1} parent=0 // pred_region
    _
  $region37: #{tpu_custom_call.1} parent=0 // pred_fallthru
    _

</llo_original>
